<compile_context>
chip_gen: v6e
topology: v6e:2x2x1
jax: 0.10.0
libtpu: 0.0.40
codegen_flags: <defaults>
</compile_context>

<pallas_src>
import functools
import warnings

import jax
import jax.numpy as jnp
from jax.experimental import pallas as pl
from jax.experimental.pallas import tpu as pltpu


# --------------------------------------------------------------------------
# Kernels
# --------------------------------------------------------------------------
def _affine_kernel(x_ref, g_ref, b_ref, o_ref):
    """o = g * x + b with g/b of shape (rows, 1) broadcast across lanes."""
    x = x_ref[...].astype(jnp.float32)
    g = g_ref[...].astype(jnp.float32)
    b = b_ref[...].astype(jnp.float32)
    o_ref[...] = (x * g + b).astype(o_ref.dtype)


def _affine_rows_kernel(tile_r, x_ref, g_ref, b_ref, o_ref):
    """Row-tiled variant: g_ref/b_ref hold ALL rows (VMEM-resident across the
    grid); slice out this tile's rows with an aligned dynamic slice."""
    r0 = pl.multiple_of(pl.program_id(0) * tile_r, 8)
    g = g_ref[pl.ds(r0, tile_r), :].astype(jnp.float32)
    b = b_ref[pl.ds(r0, tile_r), :].astype(jnp.float32)
    x = x_ref[...].astype(jnp.float32)
    o_ref[...] = (x * g + b).astype(o_ref.dtype)


# --------------------------------------------------------------------------
# Tiling plan
# --------------------------------------------------------------------------
def _cdiv(a, b):
    return -(-a // b)


def _round_up(a, b):
    return _cdiv(a, b) * b


@functools.lru_cache(maxsize=1)
def _vmem_capacity_bytes():
    try:
        return int(pltpu.get_tpu_info().vmem_capacity_bytes)
    except Exception:
        return 64 * 1024 * 1024  # conservative: v7x per-TensorCore VMEM


_SMALL_SLAB_BYTES = 512 * 1024
_SUBLANE_BY_ITEMSIZE = {1: 32, 2: 16, 4: 8, 8: 8}


def _plan(R, L, dtype):
    """Return (mode, tile, n_tiles, budget_bytes).

    mode: "single" (whole slab, no grid), "rows" (tile over rows),
          "lanes" (R < sublane pack: tile over the lane axis instead).
    """
    itemsize = jnp.dtype(dtype).itemsize
    sublane = _SUBLANE_BY_ITEMSIZE.get(itemsize, 8)
    row_bytes = L * itemsize
    slab_bytes = R * row_bytes

    vmem_cap = _vmem_capacity_bytes()
    # v7x: 64 MiB per TensorCore -> cap tiles at ~6 MiB.
    # v5e/v6e: 128 MiB physical -> ~12 MiB tiles (vmem_limit_bytes raised).
    budget = 6 * 1024 * 1024 if vmem_cap <= 64 * 1024 * 1024 else 12 * 1024 * 1024

    if slab_bytes <= _SMALL_SLAB_BYTES:
        return "single", R, 1, budget

    if R < sublane:
        # Too few rows to row-tile; tile along the (large) lane axis.
        max_l = max(128, (budget // max(1, R * itemsize)) // 128 * 128)
        tile_l = min(max_l, _round_up(_cdiv(L, 2), 128))
        tile_l = min(tile_l, _round_up(L, 128))
        n_tiles = _cdiv(L, tile_l)
        if n_tiles == 1:
            return "single", R, 1, budget
        return "lanes", tile_l, n_tiles, budget

    # Largest multiple-of-sublane row tile within budget; at least 2 tiles so
    # both v7x TensorCores get work (one extra cheap grid step on v5e/v6e).
    max_rows = max(sublane, (budget // max(1, row_bytes)) // sublane * sublane)
    tile_r = min(max_rows, _round_up(_cdiv(R, 2), sublane))
    n_tiles = _cdiv(R, tile_r)
    if n_tiles > 2 and n_tiles % 2 == 1:
        # Prefer an even tile count to keep the two v7x cores balanced.
        tile_r2 = _round_up(_cdiv(R, n_tiles + 1), sublane)
        if tile_r2 >= sublane:
            tile_r = tile_r2
            n_tiles = _cdiv(R, tile_r)
    if n_tiles == 1:
        return "single", R, 1, budget
    return "rows", tile_r, n_tiles, budget


# --------------------------------------------------------------------------
# fn(x) = gamma * x + beta over a lane-dense (R, L) slab
# --------------------------------------------------------------------------
def _apply_fn(x2, g2, b2):
    R, L = x2.shape
    itemsize = jnp.dtype(x2.dtype).itemsize
    mode, tile, n_tiles, _ = _plan(R, L, x2.dtype)

    cost = pl.CostEstimate(flops=2 * R * L,
                           bytes_accessed=2 * R * L * itemsize,
                           transcendentals=0)

    if mode == "single":
        # Small slab: one block in VMEM, no grid-loop overhead.
        return pl.pallas_call(
            _affine_kernel,
            out_shape=jax.ShapeDtypeStruct((R, L), x2.dtype),
            input_output_aliases={0: 0},
            cost_estimate=cost,
        )(x2, g2, b2)

    vmem_cap = _vmem_capacity_bytes()
    g_item = jnp.dtype(g2.dtype).itemsize

    if mode == "rows":
        tile_r = tile
        # Pad gamma/beta rows up to the gridded extent so the in-kernel slice
        # of the resident (R_pad, 1) block never reads out of bounds for the
        # partial last x block (those extra rows are never written back).
        R_pad = n_tiles * tile_r
        if R_pad != R:
            g2 = jnp.pad(g2, ((0, R_pad - R), (0, 0)))
            b2 = jnp.pad(b2, ((0, R_pad - R), (0, 0)))
        tile_bytes = tile_r * L * itemsize
        gb_vmem = 4 * _round_up(R_pad, 8) * 128 * g_item  # padded layout, 2 arrays
        vmem_limit = min(int(0.9 * vmem_cap), 4 * tile_bytes + gb_vmem + (4 << 20))
        return pl.pallas_call(
            functools.partial(_affine_rows_kernel, tile_r),
            out_shape=jax.ShapeDtypeStruct((R, L), x2.dtype),
            grid=(n_tiles,),
            in_specs=[
                pl.BlockSpec((tile_r, L), lambda i: (i, 0)),
                pl.BlockSpec((R_pad, 1), lambda i: (0, 0)),  # resident, DMA'd once
                pl.BlockSpec((R_pad, 1), lambda i: (0, 0)),  # resident, DMA'd once
            ],
            out_specs=pl.BlockSpec((tile_r, L), lambda i: (i, 0)),
            input_output_aliases={0: 0},
            cost_estimate=cost,
            compiler_params=pltpu.CompilerParams(
                dimension_semantics=("parallel",),
                vmem_limit_bytes=int(vmem_limit)),
        )(x2, g2, b2)

    # mode == "lanes": fewer than one sublane pack of rows, tile the lane axis.
    tile_l = tile
    tile_bytes = R * tile_l * itemsize
    gb_vmem = 4 * _round_up(R, 8) * 128 * g_item
    vmem_limit = min(int(0.9 * vmem_cap), 4 * tile_bytes + gb_vmem + (4 << 20))
    return pl.pallas_call(
        _affine_kernel,
        out_shape=jax.ShapeDtypeStruct((R, L), x2.dtype),
        grid=(n_tiles,),
        in_specs=[
            pl.BlockSpec((R, tile_l), lambda j: (0, j)),
            pl.BlockSpec((R, 1), lambda j: (0, 0)),  # resident
            pl.BlockSpec((R, 1), lambda j: (0, 0)),  # resident
        ],
        out_specs=pl.BlockSpec((R, tile_l), lambda j: (0, j)),
        input_output_aliases={0: 0},
        cost_estimate=cost,
        compiler_params=pltpu.CompilerParams(
            dimension_semantics=("parallel",),
            vmem_limit_bytes=int(vmem_limit)),
    )(x2, g2, b2)


# --------------------------------------------------------------------------
# RandomApply wrapper
# --------------------------------------------------------------------------
@functools.partial(jax.jit, static_argnames=("p",), donate_argnums=(0,))
def random_apply(x, gamma, beta, key, *, p):
    """RandomApply(fn = per-channel affine, p).  x: (N,C,H,W); gamma/beta: (C,).

    Returns (out, u) where u is the uniform draw (apply fn iff u <= p),
    mirroring PyTorch's `if random.random() > p: return x`.
    """
    N, C, H, W = x.shape
    R, L = N * C, H * W

    # Host-side random.random() equivalent, made explicit/stateless.
    u = jax.random.uniform(key, ())

    # Lane-dense 2-D view; row r corresponds to channel r % C.
    x2 = x.reshape(R, L)
    g2 = jnp.broadcast_to(gamma[None, :], (N, C)).reshape(R, 1).astype(jnp.float32)
    b2 = jnp.broadcast_to(beta[None, :], (N, C)).reshape(R, 1).astype(jnp.float32)

    # Apply/skip decided in the wrapper: the skip path never touches VMEM.
    out2 = jax.lax.cond(
        u <= p,
        lambda ops: _apply_fn(*ops),
        lambda ops: ops[0],
        (x2, g2, b2),
    )
    return out2.reshape(N, C, H, W), u


# --------------------------------------------------------------------------
# Self-test
# --------------------------------------------------------------------------
if __name__ == "__main__":
    warnings.filterwarnings("ignore", message=".*donated buffers.*")

    root = jax.random.PRNGKey(0)
    kg, kb, k1, k2, k3 = jax.random.split(root, 5)

    def run_case(shape, p, n_trials, case_key):
        kx, kr = jax.random.split(case_key)
        N, C, H, W = shape
        x0 = jax.random.normal(kx, shape, dtype=jnp.float32)
        gamma = 1.0 + 0.1 * jax.random.normal(kg, (C,), dtype=jnp.float32)
        beta = 0.05 * jax.random.normal(kb, (C,), dtype=jnp.float32)
        fx_ref = x0 * gamma[None, :, None, None] + beta[None, :, None, None]
        for rk in jax.random.split(kr, n_trials):
            # x is donated into the jit call, so pass a fresh copy each trial.
            out, u = random_apply(jnp.copy(x0), gamma, beta, rk, p=p)
            out = jax.block_until_ready(out)
            ref = jnp.where(u <= p, fx_ref, x0)
            assert out.shape == x0.shape and out.dtype == x0.dtype
            assert jnp.allclose(out, ref, atol=1e-5, rtol=1e-5), \
                f"mismatch vs reference for shape={shape}, p={p}"

    # Small slab (single-block path); several keys exercise both branches.
    run_case((2, 4, 16, 16), 0.5, 4, k1)
    # Row-tiled grid path with a partial last block (R=15 not a tile multiple).
    run_case((3, 5, 96, 96), 1.0, 1, k2)
    # Lane-tiled path: R = N*C = 3 < 8 sublanes (typical RGB single image).
    run_case((1, 3, 224, 224), 1.0, 1, k3)

    print("KERNEL_OK")
</pallas_src>

<mosaic_0001>
module attributes {stable_mosaic.version = 11 : i64} {
  func.func @_affine_kernel(%arg0: memref<8x256xf32, #tpu.memory_space<vmem>>, %arg1: memref<8x1xf32, #tpu.memory_space<vmem>>, %arg2: memref<8x1xf32, #tpu.memory_space<vmem>>, %arg3: memref<8x256xf32, #tpu.memory_space<vmem>>) attributes {dimension_semantics = [], scalar_prefetch = 0 : i64, scratch_operands = 0 : i64, tpu.core_type = #tpu.core_type<tc>} {
    %c0 = arith.constant 0 : index
    %c0_0 = arith.constant 0 : index
    %0 = vector.load %arg0[%c0, %c0_0] : memref<8x256xf32, #tpu.memory_space<vmem>>, vector<8x256xf32>
    %c0_1 = arith.constant 0 : index
    %c0_2 = arith.constant 0 : index
    %1 = vector.load %arg1[%c0_1, %c0_2] : memref<8x1xf32, #tpu.memory_space<vmem>>, vector<8x1xf32>
    %c0_3 = arith.constant 0 : index
    %c0_4 = arith.constant 0 : index
    %2 = vector.load %arg2[%c0_3, %c0_4] : memref<8x1xf32, #tpu.memory_space<vmem>>, vector<8x1xf32>
    %3 = vector.broadcast %1 : vector<8x1xf32> to vector<8x256xf32>
    %4 = arith.mulf %0, %3 : vector<8x256xf32>
    %5 = vector.broadcast %2 : vector<8x1xf32> to vector<8x256xf32>
    %6 = arith.addf %4, %5 : vector<8x256xf32>
    %c0_5 = arith.constant 0 : index
    %c0_6 = arith.constant 0 : index
    %7 = vector.load %arg3[%c0_5, %c0_6] : memref<8x256xf32, #tpu.memory_space<vmem>>, vector<8x256xf32>
    tpu.vector_store %arg3[%c0_5, %c0_6], %6 {strides = array<i32>} : memref<8x256xf32, #tpu.memory_space<vmem>>, vector<8x256xf32>,
    return
  }
}

</mosaic_0001>

<llo_original>
// kernel: branch_1_fun.1
$region0: #{branch_1_fun.1}
  #allocation0 [shape = 'u32[]', space=smem, size = 0x4, offset = 0x4, fixed_abs, tag = 'smem constant byte address 0x4 - core index']
  #allocation1 [shape = 'u32[144,128]{1,0:T(1,128)}', space=vmem, size = 0x12000, scoped, tag = 'internal scratch']
  %s0 = inlined_call_operand.vmem [shape: f32[8,256], index: 0, kind: input, shape index: {}, may-alias: {0,3}]
  %s1 = inlined_call_operand.vmem [shape: f32[8,1], index: 1, kind: input, shape index: {}]
  %s2 = inlined_call_operand.vmem [shape: f32[8,1], index: 2, kind: input, shape index: {}]
  %s3 = inlined_call_operand.vmem [shape: f32[8,256], index: 3, kind: output, shape index: {}, may-alias: {0,3}]
  %s4 = sld [smem:[#allocation0]]
  $region22: #{branch_1_fun.1} parent=0
    _
  %s6 = ssub.s32 1, %s4
  %s7 = scalar_select 0, %s6, %s4
  // Predicated region
  $region2: #{branch_1_fun.1} parent=0 // pred_check
    _
  $region3: #{branch_1_fun.1} parent=0 // pred_check_branch
    %9 = sbr.rel (0) target = $region5
  $region4: #{branch_1_fun.1} parent=0 // pred_region
    _
  $region5: #{branch_1_fun.1} parent=0 // pred_fallthru
    _
  // Predicated region
  $region6: #{branch_1_fun.1} parent=0 // pred_check
    _
  $region7: #{branch_1_fun.1} parent=0 // pred_check_branch
    %11 = sbr.rel (0) target = $region9
  $region8: #{branch_1_fun.1} parent=0 // pred_region
    _
  $region9: #{branch_1_fun.1} parent=0 // pred_fallthru
    _
  // Predicated region
  $region10: #{branch_1_fun.1} parent=0 // pred_check
    _
  $region11: #{branch_1_fun.1} parent=0 // pred_check_branch
    %13 = sbr.rel (0) target = $region13
  $region12: #{branch_1_fun.1} parent=0 // pred_region
    _
  $region13: #{branch_1_fun.1} parent=0 // pred_fallthru
    _
  %v14 = vld [vmem:[%s0] sm:$0xff]
  %v15 = vld [vmem:[%s0 + $0x8] sm:$0xff]
  %v16 = vld [vmem:[%s1] sm:$0xff]
  %v17 = vld [vmem:[%s2] sm:$0xff]
  %19 = vset.pattern.permute.xlu0 0
  %20 = vperm.xlu0 %19, %v16
  %v21 = vpop.permute.xlu0 %20
  %v23 = vmul.f32 %v14, %v21
  %v24 = vmul.f32 %v15, %v21
  %26 = vset.pattern.permute.xlu0 0
  %27 = vperm.xlu0 %26, %v17
  %v28 = vpop.permute.xlu0 %27
  %v30 = vadd.f32 %v23, %v28
  %v31 = vadd.f32 %v24, %v28
  %32 = vst [vmem:[%s3] sm:$0xff] %v30
  %33 = vst [vmem:[%s3 + $0x8] sm:$0xff] %v31
  // Predicated region
  $region14: #{branch_1_fun.1} parent=0 // pred_check
    _
  $region15: #{branch_1_fun.1} parent=0 // pred_check_branch
    %35 = sbr.rel (0) target = $region17
  $region16: #{branch_1_fun.1} parent=0 // pred_region
    _
  $region17: #{branch_1_fun.1} parent=0 // pred_fallthru
    _
  // Predicated region
  $region18: #{branch_1_fun.1} parent=0 // pred_check
    _
  $region19: #{branch_1_fun.1} parent=0 // pred_check_branch
    %37 = sbr.rel (0) target = $region21
  $region20: #{branch_1_fun.1} parent=0 // pred_region
    _
  $region21: #{branch_1_fun.1} parent=0 // pred_fallthru
    _

</llo_original>
